<compile_context>
chip_gen: v6e
topology: v6e:2x2x1
jax: 0.10.0
libtpu: 0.0.40
codegen_flags: <defaults>
</compile_context>

<pallas_src>
import jax
import jax.numpy as jnp
from jax.experimental import pallas as pl
from jax.experimental.pallas import tpu as pltpu

LANES = 128
SUBLANES = 8


def _tpu_cores_and_max_rows():
    """Returns (#TensorCores per chip, max tile rows) from the device kind."""
    try:
        kind = jax.devices()[0].device_kind.lower()
    except Exception:
        kind = ""
    if "v7" in kind or "7x" in kind:
        # v7x: 2 TCs/chip, ~3.2 TB/s HBM per TC -> 4 MiB f32 tiles (8192 x 128).
        return 2, 8192
    # v5e / v6e: 1 TC -> 2 MiB f32 tiles (4096 x 128); double-buffered
    # (2 inputs x 2 bufs x 2 MiB = 8 MiB) fits the 16 MiB default scoped VMEM.
    return 1, 4096


def _pick_tile_rows(rows: int, max_tile_rows: int) -> int:
    """Tile height: big tiles for large inputs, >= ~8 reduction steps otherwise."""
    if rows >= 8 * max_tile_rows:
        return max_tile_rows
    t = rows // 8                      # aim for ~8 pipelined reduction steps
    if t >= 64:
        return (t // 64) * 64          # multiple of 64 -> clean 64-row chunks
    if t >= SUBLANES:
        return (t // SUBLANES) * SUBLANES
    if rows >= SUBLANES:
        return SUBLANES
    return 0                           # too small to tile; plain-JAX fallback


def _make_kernel(tile_rows: int):
    """Builds the per-tile sum-of-squared-diff kernel for a given tile height."""
    chunk = 64 if tile_rows % 64 == 0 else tile_rows
    n_chunks = tile_rows // chunk
    groups = chunk // SUBLANES

    def kernel(c_ref, e_ref, o_ref):
        # Zero this part's (8,128) accumulator at the first reduction step.
        @pl.when(pl.program_id(1) == 0)
        def _():
            o_ref[...] = jnp.zeros_like(o_ref)

        def body(i, acc):
            r = pl.multiple_of(i * chunk, chunk)
            d = (c_ref[pl.ds(r, chunk), :].astype(jnp.float32)
                 - e_ref[pl.ds(r, chunk), :].astype(jnp.float32))
            # (chunk,128) -> (chunk//8, 8, 128): layout-preserving grouping of
            # whole vregs; sum over the leading (non-minor) axis = pure VPU adds.
            return acc + (d * d).reshape(groups, SUBLANES, LANES).sum(axis=0)

        acc = jax.lax.fori_loop(
            0, n_chunks, body,
            jnp.zeros((SUBLANES, LANES), jnp.float32),
            unroll=min(4, n_chunks))
        o_ref[...] += acc

    return kernel


def pmsqe_loss(clean, est):
    """mean((clean - est)**2) computed with a Pallas TPU reduction kernel.

    Callers should pass bf16 `clean`/`est` directly when available: the kernel
    upcasts to f32 internally and halving the bytes read ~doubles throughput
    of this HBM-bandwidth-bound op.
    """
    assert clean.shape == est.shape, "clean/est shape mismatch"
    n = clean.size

    c = clean.reshape(-1)   # reshape of a contiguous array: free
    e = est.reshape(-1)

    rows = n // LANES
    num_cores, max_tile_rows = _tpu_cores_and_max_rows()
    tile_rows = _pick_tile_rows(rows, max_tile_rows)
    m = rows // tile_rows if tile_rows else 0

    if m == 0:
        # Input too small to tile (< 8 rows of 128 lanes): plain JAX.
        d = c.astype(jnp.float32) - e.astype(jnp.float32)
        return jnp.sum(d * d) / n

    total = jnp.float32(0.0)

    rem = n % LANES
    if rem:
        # Tiny plain-JAX tail for the <128-element remainder (no full-array pad).
        dt = (c[rows * LANES:].astype(jnp.float32)
              - e[rows * LANES:].astype(jnp.float32))
        total = total + jnp.sum(dt * dt)
        c = c[:rows * LANES]
        e = e[:rows * LANES]

    c2d = c.reshape(rows, LANES)
    e2d = e.reshape(rows, LANES)

    # One reduction chain per TensorCore; single chain on 1-TC chips so the
    # pipeline has a long steady state.
    num_parts = num_cores if (num_cores > 1 and m >= num_cores) else 1
    inner = m // num_parts
    covered_rows = num_parts * inner * tile_rows

    covered = covered_rows * LANES
    itemsize = clean.dtype.itemsize
    cost = pl.CostEstimate(
        flops=3 * covered,
        transcendentals=0,
        bytes_accessed=2 * covered * itemsize + num_parts * SUBLANES * LANES * 4,
    )

    if num_parts > 1:
        dim_sem = (pltpu.CORE_PARALLEL, pltpu.ARBITRARY)   # split across TCs (v7x)
    else:
        dim_sem = ("arbitrary", "arbitrary")

    partials = pl.pallas_call(
        _make_kernel(tile_rows),
        out_shape=jax.ShapeDtypeStruct((num_parts * SUBLANES, LANES), jnp.float32),
        grid=(num_parts, inner),
        in_specs=[
            pl.BlockSpec((tile_rows, LANES), lambda p, j: (p * inner + j, 0)),
            pl.BlockSpec((tile_rows, LANES), lambda p, j: (p * inner + j, 0)),
        ],
        out_specs=pl.BlockSpec((SUBLANES, LANES), lambda p, j: (p, 0)),
        compiler_params=pltpu.CompilerParams(dimension_semantics=dim_sem),
        cost_estimate=cost,
    )(c2d, e2d)

    total = total + jnp.sum(partials)

    if covered_rows < rows:
        # Leftover rows (< 1 tile per part): tiny plain-JAX tail.
        dt = (c2d[covered_rows:].astype(jnp.float32)
              - e2d[covered_rows:].astype(jnp.float32))
        total = total + jnp.sum(dt * dt)

    return total / n


if __name__ == "__main__":
    key = jax.random.PRNGKey(0)
    k1, k2, k3, k4 = jax.random.split(key, 4)

    # Small shapes consistent with the module's forward (any matching shapes).
    shape = (2, 4, 16, 16)
    clean = jax.random.normal(k1, shape, dtype=jnp.float32)
    est = jax.random.normal(k2, shape, dtype=jnp.float32)

    loss = jax.block_until_ready(pmsqe_loss(clean, est))
    ref = jnp.mean((clean - est) ** 2)
    assert jnp.allclose(loss, ref, rtol=1e-5, atol=1e-6), (loss, ref)

    # Also exercise the multi-step + ragged-remainder + leftover-row paths.
    shape2 = (3, 9, 113)   # n = 3051: n % 128 != 0 and rows % tile != 0
    clean2 = jax.random.normal(k3, shape2, dtype=jnp.float32)
    est2 = jax.random.normal(k4, shape2, dtype=jnp.float32)
    loss2 = jax.block_until_ready(pmsqe_loss(clean2, est2))
    ref2 = jnp.mean((clean2 - est2) ** 2)
    assert jnp.allclose(loss2, ref2, rtol=1e-5, atol=1e-6), (loss2, ref2)

    print("KERNEL_OK")
</pallas_src>

<mosaic_0001>
module attributes {stable_mosaic.version = 11 : i64} {
  func.func @kernel(%arg0: i32, %arg1: i32, %arg2: memref<8x128xf32, #tpu.memory_space<vmem>>, %arg3: memref<8x128xf32, #tpu.memory_space<vmem>>, %arg4: memref<8x128xf32, #tpu.memory_space<vmem>>) attributes {dimension_semantics = [#tpu.dimension_semantics<arbitrary>, #tpu.dimension_semantics<arbitrary>], iteration_bounds = array<i64: 1, 2>, scalar_prefetch = 0 : i64, scratch_operands = 0 : i64, tpu.core_type = #tpu.core_type<tc>, window_params = [{transform_indices = @transform_0, window_bounds = array<i64: 8, 128>}, {transform_indices = @transform_1, window_bounds = array<i64: 8, 128>}, {transform_indices = @transform_2, window_bounds = array<i64: 8, 128>}]} {
    %c0_i32 = arith.constant 0 : i32
    %0 = arith.cmpi eq, %arg1, %c0_i32 : i32
    %1 = arith.extui %0 : i1 to i32
    %c0_i32_0 = arith.constant 0 : i32
    %2 = arith.cmpi ne, %1, %c0_i32_0 : i32
    scf.if %2 {
      %cst_8 = arith.constant 0.000000e+00 : f32
      %18 = vector.broadcast %cst_8 : f32 to vector<8x128xf32>
      %c0_9 = arith.constant 0 : index
      %c0_10 = arith.constant 0 : index
      %19 = vector.load %arg4[%c0_9, %c0_10] : memref<8x128xf32, #tpu.memory_space<vmem>>, vector<8x128xf32>
      tpu.vector_store %arg4[%c0_9, %c0_10], %18 {strides = array<i32>} : memref<8x128xf32, #tpu.memory_space<vmem>>, vector<8x128xf32>,
    } else {
    }
    %cst = arith.constant 0.000000e+00 : f32
    %3 = vector.broadcast %cst : f32 to vector<8x128xf32>
    %c0_i32_1 = arith.constant 0 : i32
    %c8_i32 = arith.constant 8 : i32
    %4 = arith.muli %c0_i32_1, %c8_i32 : i32
    %5 = tpu.assume_multiple %4, 8 : i32
    %6 = arith.index_cast %5 : i32 to index
    %c0 = arith.constant 0 : index
    %7 = vector.load %arg2[%6, %c0] : memref<8x128xf32, #tpu.memory_space<vmem>>, vector<8x128xf32>
    %8 = arith.index_cast %5 : i32 to index
    %c0_2 = arith.constant 0 : index
    %9 = vector.load %arg3[%8, %c0_2] : memref<8x128xf32, #tpu.memory_space<vmem>>, vector<8x128xf32>
    %10 = arith.subf %7, %9 : vector<8x128xf32>
    %11 = arith.mulf %10, %10 : vector<8x128xf32>
    %12 = vector.shape_cast %11 : vector<8x128xf32> to vector<1x8x128xf32>
    %cst_3 = arith.constant dense<0.000000e+00> : vector<8x128xf32>
    %13 = vector.multi_reduction <add>, %12, %cst_3 [0] : vector<1x8x128xf32> to vector<8x128xf32>
    %14 = arith.addf %3, %13 : vector<8x128xf32>
    %c1_i32 = arith.constant 1 : i32
    %c0_4 = arith.constant 0 : index
    %c0_5 = arith.constant 0 : index
    %15 = vector.load %arg4[%c0_4, %c0_5] : memref<8x128xf32, #tpu.memory_space<vmem>>, vector<8x128xf32>
    %16 = arith.addf %15, %14 : vector<8x128xf32>
    %c0_6 = arith.constant 0 : index
    %c0_7 = arith.constant 0 : index
    %17 = vector.load %arg4[%c0_6, %c0_7] : memref<8x128xf32, #tpu.memory_space<vmem>>, vector<8x128xf32>
    tpu.vector_store %arg4[%c0_6, %c0_7], %16 {strides = array<i32>} : memref<8x128xf32, #tpu.memory_space<vmem>>, vector<8x128xf32>,
    return
  }
  func.func @transform_0(%arg0: i32, %arg1: i32) -> (i32, i32) {
    %c2_i32 = arith.constant 2 : i32
    %0 = arith.muli %arg0, %c2_i32 : i32
    %1 = arith.addi %0, %arg1 : i32
    %c0_i32 = arith.constant 0 : i32
    %c0_i32_0 = arith.constant 0 : i32
    return %1, %c0_i32 : i32, i32
  }
  func.func @transform_1(%arg0: i32, %arg1: i32) -> (i32, i32) {
    %c2_i32 = arith.constant 2 : i32
    %0 = arith.muli %arg0, %c2_i32 : i32
    %1 = arith.addi %0, %arg1 : i32
    %c0_i32 = arith.constant 0 : i32
    %c0_i32_0 = arith.constant 0 : i32
    return %1, %c0_i32 : i32, i32
  }
  func.func @transform_2(%arg0: i32, %arg1: i32) -> (i32, i32) {
    %c0_i32 = arith.constant 0 : i32
    %c0_i32_0 = arith.constant 0 : i32
    return %arg0, %c0_i32 : i32, i32
  }
}

</mosaic_0001>

<llo_original>
// kernel: tpu_custom_call.1
$region0: #{tpu_custom_call.1}
  #allocation0 [shape = 'u32[]', space=smem, size = 0x4, offset = 0x4, fixed_abs, tag = 'smem constant byte address 0x4 - core index']
  #allocation1 [shape = 'u32[144,128]{1,0:T(1,128)}', space=vmem, size = 0x12000, scoped, tag = 'internal scratch']
  %s0 = inlined_call_operand.hbm [shape: f32[16,128], index: 0, kind: input, shape index: {}]
  %s1 = inlined_call_operand.hbm [shape: f32[16,128], index: 1, kind: input, shape index: {}]
  %s2 = inlined_call_operand.hbm [shape: f32[8,128], index: 2, kind: output, shape index: {}]
  %s3 = sld [smem:[#allocation0]]
  $region53: #{tpu_custom_call.1} parent=0
    _
  %s5 = ssub.s32 1, %s3
  %s6 = scalar_select 0, %s5, %s3
  $region1: #{tpu_custom_call.1} parent=0
    #allocation2 [shape = 'u8[8192]{0}', space=vmem, size = 0x2000, scoped, tag = 'input window, operand 0']
    #allocation3 [shape = 's32[2]{0}', space=sflag, size = 0x8, scoped, tag = 'scoped memory for tpu_custom_call.1']
    #allocation4 [shape = 's32[2]{0}', space=sflag, size = 0x8, scoped, tag = 'scoped memory for tpu_custom_call.1']
    #allocation5 [shape = 'u8[8192]{0}', space=vmem, size = 0x2000, scoped, tag = 'input window, operand 1']
    #allocation6 [shape = 's32[2]{0}', space=sflag, size = 0x8, scoped, tag = 'scoped memory for tpu_custom_call.1']
    #allocation7 [shape = 'u8[4096]{0}', space=vmem, size = 0x1000, scoped, tag = 'output window, operand 0, single buffered']
    %7 = vsyncpa [#allocation3], 0
    %s8 = scalar_lea.sflag [#allocation3], 1
    %9 = vsyncpa %s8, 0
    %10 = vsyncpa [#allocation6], 0
    %s11 = scalar_lea.sflag [#allocation6], 1
    %12 = vsyncpa %s11, 0
    %13 = vsyncpa [#allocation4], 0
    loop: start=0, step=1, limit=4
    $region2: #{tpu_custom_call.1} parent=1 // loop_pre_header
      _
    $region3: #{tpu_custom_call.1} parent=1 // loop_header
      %s15 = sphi 0, %s19
      %p16 = scmp.ge.s32.totalorder %s15, 4
      %s22 = sphi 0, %s34
      %s23 = sphi 0, %s30
      %s24 = sphi 0, %s22
      %s25 = sphi 0, %s23
      %s26 = sphi 0, %s24
      %s27 = sphi 0, %s25
      %s41 = sphi 0, %s43
      %s44 = sphi 0, %s41
      %s45 = sphi 0, %s44
      %s61 = sphi 0, %s45
      %s71 = sphi 0, %s73
      %s74 = sphi 0, %s71
      %s75 = sphi 0, %s74
      %s91 = sphi 0, %s75
      %s97 = sphi 0, %s99
      %s100 = sphi 0, %s97
      %s101 = sphi 0, %s100
      %s117 = sphi 0, %s101
    $region4: #{tpu_custom_call.1} parent=1 // loop_header_branch
      %18 = sbr.rel (%p16) target = $region8
    $region5: #{tpu_custom_call.1} parent=1 // loop_body
      %s20 = ssub.s32 %s15, 1
      %s21 = ssub.s32 %s15, 2
      %s28 = sadd.s32 1, %s23
      %p29 = scmp.ge.s32.totalorder %s28, 2
      %s30 = scalar_select %p29, 0, %s28
      %s31 = sadd.s32 1, %s22
      %s32 = scalar_select %p29, %s31, %s22
      %p33 = scmp.ge.s32.totalorder %s32, 1
      %s34 = scalar_select %p33, 0, %s32
      %s35 = smul.u32 %s22, 2
      %s36 = sadd.s32 %s35, %s23
      %s37 = smul.u32 %s34, 2
      %s38 = sadd.s32 %s37, %s30
      %s39 = ssub.s32 %s36, %s38
      %p40 = scmp.eq.s32.totalorder %s39, 0
      %s42 = sadd.s32 %s41, 1
      %s43 = scalar_select %p40, %s41, %s42
      %p46 = pneg %p40
      %p47 = scmp.eq.s32.totalorder %s15, 1
      %p48 = por %p46, %p47
      %p49 = scmp.ne.s32.totalorder %s41, %s44
      %p50 = scmp.eq.s32.totalorder %s15, 0
      %p51 = por %p49, %p50
      %p52 = scmp.ne.s32.totalorder %s41, %s44
      %p53 = scmp.eq.s32.totalorder %s20, 1
      %p54 = por %p52, %p53
      %p55 = scmp.ne.s32.totalorder %s44, %s45
      %p56 = scmp.eq.s32.totalorder %s20, 0
      %p57 = por %p55, %p56
      %p58 = scmp.ne.s32.totalorder %s44, %s45
      %p59 = scmp.eq.s32.totalorder %s21, 1
      %p60 = por %p58, %p59
      %p62 = scmp.ne.s32.totalorder %s45, %s61
      %p63 = scmp.eq.s32.totalorder %s21, 0
      %p64 = por %p62, %p63
      %s65 = smul.u32 %s22, 2
      %s66 = sadd.s32 %s65, %s23
      %s67 = smul.u32 %s34, 2
      %s68 = sadd.s32 %s67, %s30
      %s69 = ssub.s32 %s66, %s68
      %p70 = scmp.eq.s32.totalorder %s69, 0
      %s72 = sadd.s32 %s71, 1
      %s73 = scalar_select %p70, %s71, %s72
      %p76 = pneg %p70
      %p77 = scmp.eq.s32.totalorder %s15, 1
      %p78 = por %p76, %p77
      %p79 = scmp.ne.s32.totalorder %s71, %s74
      %p80 = scmp.eq.s32.totalorder %s15, 0
      %p81 = por %p79, %p80
      %p82 = scmp.ne.s32.totalorder %s71, %s74
      %p83 = scmp.eq.s32.totalorder %s20, 1
      %p84 = por %p82, %p83
      %p85 = scmp.ne.s32.totalorder %s74, %s75
      %p86 = scmp.eq.s32.totalorder %s20, 0
      %p87 = por %p85, %p86
      %p88 = scmp.ne.s32.totalorder %s74, %s75
      %p89 = scmp.eq.s32.totalorder %s21, 1
      %p90 = por %p88, %p89
      %p92 = scmp.ne.s32.totalorder %s75, %s91
      %p93 = scmp.eq.s32.totalorder %s21, 0
      %p94 = por %p92, %p93
      %s95 = ssub.s32 %s22, %s34
      %p96 = scmp.eq.s32.totalorder %s95, 0
      %s98 = sadd.s32 %s97, 1
      %s99 = scalar_select %p96, %s97, %s98
      %p102 = pneg %p96
      %p103 = scmp.eq.s32.totalorder %s15, 1
      %p104 = por %p102, %p103
      %p105 = scmp.ne.s32.totalorder %s97, %s100
      %p106 = scmp.eq.s32.totalorder %s15, 0
      %p107 = por %p105, %p106
      %p108 = scmp.ne.s32.totalorder %s97, %s100
      %p109 = scmp.eq.s32.totalorder %s20, 1
      %p110 = por %p108, %p109
      %p111 = scmp.ne.s32.totalorder %s100, %s101
      %p112 = scmp.eq.s32.totalorder %s20, 0
      %p113 = por %p111, %p112
      %p114 = scmp.ne.s32.totalorder %s100, %s101
      %p115 = scmp.eq.s32.totalorder %s21, 1
      %p116 = por %p114, %p115
      %p118 = scmp.ne.s32.totalorder %s101, %s117
      %p119 = scmp.eq.s32.totalorder %s21, 0
      %p120 = por %p118, %p119
      %p121 = scmp.le.s32.totalorder 1, %s15
      %p122 = scmp.lt.s32.totalorder %s15, 3
      %p123 = pnand %p121, %p122
      %p124 = pneg %p123
      // Predicated region
      $region9: #{tpu_custom_call.1} parent=5 // pred_check
        _
      $region10: #{tpu_custom_call.1} parent=5 // pred_check_branch
        %126 = sbr.rel (%p123) target = $region12
      $region11: #{tpu_custom_call.1} parent=5 // pred_region
        %s127 = ssub.s32 %s15, 1
      $region12: #{tpu_custom_call.1} parent=5 // pred_fallthru
        _
      %p128 = scmp.lt.s32.totalorder %s15, 2
      // Predicated region
      $region13: #{tpu_custom_call.1} parent=5 // pred_check
        %p129 = pneg %p128
      $region14: #{tpu_custom_call.1} parent=5 // pred_check_branch
        %131 = sbr.rel (%p129) target = $region16
      $region15: #{tpu_custom_call.1} parent=5 // pred_region
        // Predicated region
        $region17: #{tpu_custom_call.1} parent=15 // pred_check
          %p132 = pneg %p51
        $region18: #{tpu_custom_call.1} parent=15 // pred_check_branch
          %134 = sbr.rel (%p132) target = $region20
        $region19: #{tpu_custom_call.1} parent=15 // pred_region
          %s135 = sand.u32 %s41, 1
          %s136 = scalar_lea.sflag [#allocation3], %s135
          %s137 = sand.u32 %s41, 1
          %s138 = smul.addr %s137, 8
          %s139 = scalar_lea.vmem [#allocation2], %s138
          %s140 = smul.u32 %s22, 2
          %s141 = sadd.s32 %s140, %s23
          %s143 = ssub.s32 128, 128
          %144 = vsyncadd %s136, %s143
          %s145 = smul.addr %s141, 128
          %s146 = scalar_lea.hbm %s0, %s145
          %s148 = sshll.u32 %s139, 4
          %s149 = int_to_ptr.vmem [resolvable:$true] %s148
          %151 = dma.hbm_to_vmem [thread:$0]  %s146, 128, %s149, %s136
        $region20: #{tpu_custom_call.1} parent=15 // pred_fallthru
          _
        // Predicated region
        $region21: #{tpu_custom_call.1} parent=15 // pred_check
          %p152 = pneg %p81
        $region22: #{tpu_custom_call.1} parent=15 // pred_check_branch
          %154 = sbr.rel (%p152) target = $region24
        $region23: #{tpu_custom_call.1} parent=15 // pred_region
          %s155 = sand.u32 %s71, 1
          %s156 = scalar_lea.sflag [#allocation6], %s155
          %s157 = sand.u32 %s71, 1
          %s158 = smul.addr %s157, 8
          %s159 = scalar_lea.vmem [#allocation5], %s158
          %s160 = smul.u32 %s22, 2
          %s161 = sadd.s32 %s160, %s23
          %s163 = ssub.s32 128, 128
          %164 = vsyncadd %s156, %s163
          %s165 = smul.addr %s161, 128
          %s166 = scalar_lea.hbm %s1, %s165
          %s168 = sshll.u32 %s159, 4
          %s169 = int_to_ptr.vmem [resolvable:$true] %s168
          %171 = dma.hbm_to_vmem [thread:$0]  %s166, 128, %s169, %s156
        $region24: #{tpu_custom_call.1} parent=15 // pred_fallthru
          _
      $region16: #{tpu_custom_call.1} parent=5 // pred_fallthru
        _
      %p172 = scmp.le.s32.totalorder 1, %s15
      %p173 = scmp.lt.s32.totalorder %s15, 3
      %p174 = pnand %p172, %p173
      %p175 = pneg %p174
      // Predicated region
      $region25: #{tpu_custom_call.1} parent=5 // pred_check
        _
      $region26: #{tpu_custom_call.1} parent=5 // pred_check_branch
        %177 = sbr.rel (%p174) target = $region28
      $region27: #{tpu_custom_call.1} parent=5 // pred_region
        %s178 = ssub.s32 %s15, 1
        %s179 = sand.u32 %s44, 1
        %s180 = scalar_lea.sflag [#allocation3], %s179
        %s181 = sand.u32 %s44, 1
        %s182 = smul.addr %s181, 8
        %s183 = scalar_lea.vmem [#allocation2], %s182
        // Predicated region
        $region29: #{tpu_custom_call.1} parent=27 // pred_check
          %p184 = pneg %p57
        $region30: #{tpu_custom_call.1} parent=27 // pred_check_branch
          %186 = sbr.rel (%p184) target = $region32
        $region31: #{tpu_custom_call.1} parent=27 // pred_region
          %187 = dma.done %s180, 128
        $region32: #{tpu_custom_call.1} parent=27 // pred_fallthru
          _
        %s188 = sand.u32 %s74, 1
        %s189 = scalar_lea.sflag [#allocation6], %s188
        %s190 = sand.u32 %s74, 1
        %s191 = smul.addr %s190, 8
        %s192 = scalar_lea.vmem [#allocation5], %s191
        // Predicated region
        $region33: #{tpu_custom_call.1} parent=27 // pred_check
          %p193 = pneg %p87
        $region34: #{tpu_custom_call.1} parent=27 // pred_check_branch
          %195 = sbr.rel (%p193) target = $region36
        $region35: #{tpu_custom_call.1} parent=27 // pred_region
          %196 = dma.done %s189, 128
        $region36: #{tpu_custom_call.1} parent=27 // pred_fallthru
          _
        %s197 = sand.u32 %s44, 1
        %s198 = scalar_lea.sflag [#allocation3], %s197
        %s199 = sand.u32 %s44, 1
        %s200 = smul.addr %s199, 8
        %s201 = scalar_lea.vmem [#allocation2], %s200
        %p202 = pneg %p57
        %p203 = pneg %p54
        %s204 = sand.u32 %s74, 1
        %s205 = scalar_lea.sflag [#allocation6], %s204
        %s206 = sand.u32 %s74, 1
        %s207 = smul.addr %s206, 8
        %s208 = scalar_lea.vmem [#allocation5], %s207
        %p209 = pneg %p87
        %p210 = pneg %p84
        %p211 = pneg %p113
        %p212 = pneg %p110
        %s213 = smul.u32 %s24, 2
        %s214 = sadd.s32 %s213, %s25
        %s215 = smul.u32 %s24, 2
        %s216 = sadd.s32 %s215, %s25
        %p217 = scmp.eq.s32.totalorder %s25, 0
        // Predicated region
        $region37: #{tpu_custom_call.1} parent=27 // pred_check
          %p218 = pneg %p217
        $region38: #{tpu_custom_call.1} parent=27 // pred_check_branch
          %220 = sbr.rel (%p218) target = $region40
        $region39: #{tpu_custom_call.1} parent=27 // pred_region
          %221 = vst [vmem:[#allocation7] sm:$0xff] 0.0
        $region40: #{tpu_custom_call.1} parent=27 // pred_fallthru
          _
        %v222 = vld [vmem:[%s183] sm:$0xff]
        %v223 = vld [vmem:[%s192] sm:$0xff]
        %v224 = vsub.f32 %v222, %v223
        %v225 = vmul.f32 %v224, %v224
        %v226 = vadd.f32 %v225, 0.0
        %v227 = vadd.f32 %v226, 0.0
        %v228 = vld [vmem:[#allocation7] sm:$0xff]
        %v229 = vadd.f32 %v228, %v227
        %230 = vst [vmem:[#allocation7] sm:$0xff] %v229
        // Predicated region
        $region41: #{tpu_custom_call.1} parent=27 // pred_check
          %p231 = pneg %p110
        $region42: #{tpu_custom_call.1} parent=27 // pred_check_branch
          %233 = sbr.rel (%p231) target = $region44
        $region43: #{tpu_custom_call.1} parent=27 // pred_region
          %s235 = ssub.s32 128, 128
          %236 = vsyncadd [#allocation4], %s235
          %s237 = smul.addr %s24, 128
          %s238 = scalar_lea.hbm %s2, %s237
          %s240 = sshll.u32 [#allocation7], 4
          %s241 = int_to_ptr.vmem [resolvable:$true] %s240
          %243 = dma.vmem_to_hbm [thread:$0]  %s241, 128, %s238, [#allocation4]
        $region44: #{tpu_custom_call.1} parent=27 // pred_fallthru
          _
        // Predicated region
        $region45: #{tpu_custom_call.1} parent=27 // pred_check
          %p244 = pneg %p110
        $region46: #{tpu_custom_call.1} parent=27 // pred_check_branch
          %246 = sbr.rel (%p244) target = $region48
        $region47: #{tpu_custom_call.1} parent=27 // pred_region
          %247 = dma.done [#allocation4], 128
        $region48: #{tpu_custom_call.1} parent=27 // pred_fallthru
          _
      $region28: #{tpu_custom_call.1} parent=5 // pred_fallthru
        _
      %p248 = scmp.le.s32.totalorder 2, %s15
      // Predicated region
      $region49: #{tpu_custom_call.1} parent=5 // pred_check
        %p249 = pneg %p248
      $region50: #{tpu_custom_call.1} parent=5 // pred_check_branch
        %251 = sbr.rel (%p249) target = $region52
      $region51: #{tpu_custom_call.1} parent=5 // pred_region
        %s252 = ssub.s32 %s15, 2
      $region52: #{tpu_custom_call.1} parent=5 // pred_fallthru
        _
    $region6: #{tpu_custom_call.1} parent=1 // loop_footer
      %s19 = sadd.s32 1, %s15
    $region7: #{tpu_custom_call.1} parent=1 // loop_footer_branch
      %14 = sbr.rel target = $region3
    $region8: #{tpu_custom_call.1} parent=1 // loop_exit
      _
    %253 = vsyncpa [#allocation3], 1
    %s254 = scalar_lea.sflag [#allocation3], 1
    %255 = vsyncpa %s254, 1
    %256 = vsyncpa [#allocation6], 1
    %s257 = scalar_lea.sflag [#allocation6], 1
    %258 = vsyncpa %s257, 1
    %259 = vsyncpa [#allocation4], 1
    %s260 = scalar_lea.sflag [#allocation4], 1
    %261 = vsyncpa %s260, 1

</llo_original>
